<compile_context>
chip_gen: v7x
topology: tpu7x:2x2x1
jax: 0.10.0
libtpu: 0.0.40
codegen_flags: <defaults>
</compile_context>

<pallas_src>
import math
import functools

import jax
import jax.numpy as jnp
from jax.experimental import pallas as pl
from jax.experimental.pallas import tpu as pltpu


def _round_up(a, b):
    return ((a + b - 1) // b) * b


def cam_kernel(x_ref, wf_ref, vhat_ref, ones_ref, wfc_ref, gamma_ref, beta_ref,
               o_ref, *, cp, inv_c, eps):
    """One (batch, query-tile) grid step.

    x_ref     : (1, TQ, Cp)       bf16 content tokens (row / channel padded, pads = 0)
    wf_ref    : (1, Cp, Cp + mN)  bf16 per-batch fused weight [Wq | Wq @ khat_b^T]
    vhat_ref  : (1, mN, Cp)       bf16 head-block-masked value rows (row h*N+n = head h)
    ones_ref  : (mN, Cp)          bf16 head-membership matrix (softmax denominators)
    wfc_ref   : (Cp, Cp)          bf16 row-permuted concat-FC weight
    gamma/beta: (1, Cp)           f32  permuted LayerNorm affine (0 on pad lanes)
    o_ref     : (1, TQ, Cp)       bf16 output tokens (pads are garbage-free zeros)
    """
    x = x_ref[0]                                                     # (TQ, Cp)

    # Fused projection + scores: one MXU matmul yields q and the pre-scaled
    # all-head attention logits (1/sqrt(d) and the head masking are folded into
    # the fused weight in the wrapper).
    qs = jnp.dot(x, wf_ref[0], preferred_element_type=jnp.float32)   # (TQ, Cp+mN)
    q = qs[:, :cp]                                                   # (TQ, Cp)
    s = qs[:, cp:]                                                   # (TQ, mN)

    # Per-head softmax.  A row-global max is a valid stabilizer (cancels within
    # each head); no padded score columns exist (mN is exact).
    s = s - jnp.max(s, axis=-1, keepdims=True)
    e = jnp.exp(s).astype(jnp.bfloat16)                              # (TQ, mN)

    # denom[:, c] = sum of e over the head that owns channel c  (per-head Z,
    # already lane-broadcast), num = unnormalized per-head attention output.
    denom = jnp.dot(e, ones_ref[...], preferred_element_type=jnp.float32)   # (TQ, Cp)
    num = jnp.dot(e, vhat_ref[0], preferred_element_type=jnp.float32)       # (TQ, Cp)
    out = num * pl.reciprocal(jnp.maximum(denom, 1e-30), approx=True)

    # Residual + LayerNorm over the real C channels.  Pad lanes of q and out are
    # exactly zero (zero Wq pad columns, masked vhat), so plain lane sums equal
    # sums over the real channels and no masking passes are needed.
    y = out + q
    mean = jnp.sum(y, axis=-1, keepdims=True) * inv_c
    var = jnp.sum(y * y, axis=-1, keepdims=True) * inv_c - mean * mean
    var = jnp.maximum(var, 0.0)
    yhat = (y - mean) * jax.lax.rsqrt(var + eps)
    ln = yhat * gamma_ref[...] + beta_ref[...]        # gamma/beta are 0 on pad lanes

    # Multihead concat FC (weight rows already permuted to head-blocked order).
    o_ref[0] = jnp.dot(ln.astype(jnp.bfloat16), wfc_ref[...],
                       preferred_element_type=jnp.float32).astype(jnp.bfloat16)


def component_attention(content_feature, components, style_components, params,
                        num_heads=4):
    B, C, H, W = content_feature.shape
    HW = H * W
    N = components.shape[1]
    m = num_heads
    d = C // m
    mN = m * N

    Cp = _round_up(C, 128)                     # lane-dense channel pad

    # Query-row tile: as large as VMEM comfortably allows.  v7x has half the
    # VMEM of v5e/v6e, so cap tighter for wide channel counts; HW is padded to
    # a TQ multiple (pad query rows are zeros and are sliced off afterwards).
    if Cp <= 256:
        cap = 2048
    elif Cp <= 512:
        cap = 1024
    else:
        cap = 512
    TQ = min(cap, _round_up(HW, 8))
    HW_pad = _round_up(HW, TQ)
    n_t = HW_pad // TQ
    # NOTE: grid = (B, n_t); B * n_t >= 2 keeps both v7x TensorCores busy.

    # --- content tokens: NCHW -> (B, HW, C) -> padded bf16 -----------------
    x = jnp.transpose(content_feature, (0, 2, 3, 1)).reshape(B, HW, C)
    x = jnp.pad(x, ((0, 0), (0, HW_pad - HW), (0, Cp - C))).astype(jnp.bfloat16)

    def pad2(w):
        return jnp.pad(w, ((0, Cp - C), (0, Cp - C)))

    wq_t = pad2(params["wq"].T)                # (Cp, Cp) f32 (nn.Linear: y = x @ W^T)
    wk_t = params["wk"].T                      # (C, C)
    wv_t = params["wv"].T

    # Head membership: row j (= h*N + n) owns channels [h*d, (h+1)*d).
    r_head = jnp.arange(mN) // N
    cidx = jnp.arange(Cp)
    head_mask = ((r_head[:, None] == (cidx // d)[None, :])
                 & (cidx < C)[None, :]).astype(jnp.float32)          # (mN, Cp)

    # --- hoisted per-batch K-hat / V-hat (batch-invariant w.r.t. query tile) --
    k_all = jnp.einsum('bnc,cd->bnd', components, wk_t)              # (B, N, C)
    v_all = jnp.einsum('bnc,cd->bnd', style_components, wv_t)
    k_all = jnp.pad(k_all, ((0, 0), (0, 0), (0, Cp - C)))
    v_all = jnp.pad(v_all, ((0, 0), (0, 0), (0, Cp - C)))
    khat = jnp.tile(k_all, (1, m, 1)) * head_mask[None] * (1.0 / math.sqrt(d))
    vhat = (jnp.tile(v_all, (1, m, 1)) * head_mask[None]).astype(jnp.bfloat16)

    # Fused per-batch weight: x @ [Wq | Wq @ khat_b^T] -> [q | scores].
    ws = jnp.einsum('ck,bnk->bcn', wq_t, khat)                       # (B, Cp, mN)
    w_fused = jnp.concatenate(
        [jnp.broadcast_to(wq_t[None], (B, Cp, Cp)), ws], axis=2
    ).astype(jnp.bfloat16)                                           # (B, Cp, Cp+mN)

    # head-blocked channel k = h*d + i  <->  PyTorch '(c m)' index j = i*m + h
    i = jnp.arange(C)
    perm = (i % d) * m + (i // d)
    gamma_p = jnp.pad(params["gamma"][perm], (0, Cp - C)).reshape(1, Cp).astype(jnp.float32)
    beta_p = jnp.pad(params["beta"][perm], (0, Cp - C)).reshape(1, Cp).astype(jnp.float32)
    wfc_t_p = pad2(params["wfc"].T[perm, :]).astype(jnp.bfloat16)

    ones_chan = head_mask.astype(jnp.bfloat16)                       # (mN, Cp)

    kernel = functools.partial(cam_kernel, cp=Cp, inv_c=1.0 / C, eps=1e-6)

    flops = 2 * B * HW_pad * (Cp * (Cp + mN)       # fused q + scores
                              + 2 * mN * Cp        # denominators + e @ vhat
                              + Cp * Cp)           # concat FC
    transcendentals = B * HW_pad * (mN + Cp + 1)
    bytes_accessed = int(x.size * 2 + w_fused.size * 2 + vhat.size * 2
                         + ones_chan.size * 2 + wfc_t_p.size * 2
                         + 2 * Cp * 4 + B * HW_pad * Cp * 2)

    out = pl.pallas_call(
        kernel,
        out_shape=jax.ShapeDtypeStruct((B, HW_pad, Cp), jnp.bfloat16),
        grid_spec=pltpu.PrefetchScalarGridSpec(
            num_scalar_prefetch=0,
            grid=(B, n_t),
            in_specs=[
                pl.BlockSpec((1, TQ, Cp), lambda b, t: (b, t, 0)),        # x tokens
                pl.BlockSpec((1, Cp, Cp + mN), lambda b, t: (b, 0, 0)),   # fused W (per batch)
                pl.BlockSpec((1, mN, Cp), lambda b, t: (b, 0, 0)),        # vhat (per batch)
                pl.BlockSpec((mN, Cp), lambda b, t: (0, 0)),              # head membership
                pl.BlockSpec((Cp, Cp), lambda b, t: (0, 0)),              # Wfc
                pl.BlockSpec((1, Cp), lambda b, t: (0, 0)),               # gamma
                pl.BlockSpec((1, Cp), lambda b, t: (0, 0)),               # beta
            ],
            out_specs=pl.BlockSpec((1, TQ, Cp), lambda b, t: (b, t, 0)),
        ),
        compiler_params=pltpu.CompilerParams(
            dimension_semantics=("parallel", "parallel"),
            vmem_limit_bytes=32 * 1024 * 1024),
        cost_estimate=pl.CostEstimate(flops=int(flops),
                                      transcendentals=int(transcendentals),
                                      bytes_accessed=bytes_accessed),
    )(x, w_fused, vhat, ones_chan, wfc_t_p, gamma_p, beta_p)

    out = out[:, :HW, :C].astype(jnp.float32)
    # 'b (h w) c -> b c h w'
    return jnp.transpose(out.reshape(B, H, W, C), (0, 3, 1, 2))


def reference(content_feature, components, style_components, params, num_heads):
    """Pure-JAX transcription of the PyTorch forward (for sanity checking)."""
    B, C, H, W = content_feature.shape
    m = num_heads
    d = C // m
    HW = H * W

    x = jnp.transpose(content_feature, (0, 2, 3, 1)).reshape(B, HW, C)
    q = (x @ params["wq"].T).reshape(B, HW, m, d).transpose(0, 2, 1, 3).reshape(B * m, HW, d)
    k = (components @ params["wk"].T).reshape(B, -1, m, d).transpose(0, 2, 1, 3).reshape(B * m, -1, d)
    v = (style_components @ params["wv"].T).reshape(B, -1, m, d).transpose(0, 2, 1, 3).reshape(B * m, -1, d)

    scores = jnp.einsum("bqd,bkd->bqk", q, k) / math.sqrt(d)
    p = jax.nn.softmax(scores, axis=-1)
    out = jnp.einsum("bqk,bkd->bqd", p, v)

    # '(b m) hw c -> b hw (c m)'
    out = out.reshape(B, m, HW, d).transpose(0, 2, 3, 1).reshape(B, HW, C)
    res = q.reshape(B, m, HW, d).transpose(0, 2, 3, 1).reshape(B, HW, C)

    y = out + res
    mean = y.mean(-1, keepdims=True)
    var = ((y - mean) ** 2).mean(-1, keepdims=True)
    yhat = (y - mean) / jnp.sqrt(var + 1e-6)
    ln = yhat * params["gamma"] + params["beta"]
    o = ln @ params["wfc"].T
    return jnp.transpose(o.reshape(B, H, W, C), (0, 3, 1, 2))


if __name__ == "__main__":
    # Small shapes consistent with the module (C divisible by num_heads).
    B, C, H, W = 2, 64, 8, 8
    N = 8
    NUM_HEADS = 4

    key = jax.random.PRNGKey(0)
    ks = jax.random.split(key, 9)
    params = {
        "wq": 0.05 * jax.random.normal(ks[0], (C, C), jnp.float32),
        "wk": 0.05 * jax.random.normal(ks[1], (C, C), jnp.float32),
        "wv": 0.05 * jax.random.normal(ks[2], (C, C), jnp.float32),
        "wfc": 0.05 * jax.random.normal(ks[3], (C, C), jnp.float32),
        "gamma": 1.0 + 0.1 * jax.random.normal(ks[4], (C,), jnp.float32),
        "beta": 0.1 * jax.random.normal(ks[5], (C,), jnp.float32),
    }
    content_feature = jax.random.normal(ks[6], (B, C, H, W), jnp.float32)
    components = jax.random.normal(ks[7], (B, N, C), jnp.float32)
    style_components = jax.random.normal(ks[8], (B, N, C), jnp.float32)

    out = component_attention(content_feature, components, style_components,
                              params, num_heads=NUM_HEADS)
    out = jax.block_until_ready(out)

    ref = jax.block_until_ready(
        reference(content_feature, components, style_components, params, NUM_HEADS))

    assert out.shape == (B, C, H, W)
    assert jnp.allclose(out, ref, rtol=2e-2, atol=2e-2), (
        float(jnp.max(jnp.abs(out - ref))))

    print("KERNEL_OK")
</pallas_src>

<mosaic_0001>
module attributes {stable_mosaic.version = 11 : i64} {
  func.func @cam_kernel(%arg0: i32, %arg1: i32, %arg2: memref<1x64x128xbf16, #tpu.memory_space<vmem>>, %arg3: memref<1x128x160xbf16, #tpu.memory_space<vmem>>, %arg4: memref<1x32x128xbf16, #tpu.memory_space<vmem>>, %arg5: memref<32x128xbf16, #tpu.memory_space<vmem>>, %arg6: memref<128x128xbf16, #tpu.memory_space<vmem>>, %arg7: memref<1x128xf32, #tpu.memory_space<vmem>>, %arg8: memref<1x128xf32, #tpu.memory_space<vmem>>, %arg9: memref<1x64x128xbf16, #tpu.memory_space<vmem>>) attributes {dimension_semantics = [#tpu.dimension_semantics<parallel>, #tpu.dimension_semantics<parallel>], iteration_bounds = array<i64: 2, 1>, scalar_prefetch = 0 : i64, scratch_operands = 0 : i64, tpu.core_type = #tpu.core_type<tc>, window_params = [{transform_indices = @transform_0, window_bounds = array<i64: 1, 64, 128>}, {transform_indices = @transform_1, window_bounds = array<i64: 1, 128, 160>}, {transform_indices = @transform_2, window_bounds = array<i64: 1, 32, 128>}, {pipeline_mode = #tpu.pipeline_mode<synchronous>, transform_indices = @transform_3, window_bounds = array<i64: 32, 128>}, {pipeline_mode = #tpu.pipeline_mode<synchronous>, transform_indices = @transform_4, window_bounds = array<i64: 128, 128>}, {pipeline_mode = #tpu.pipeline_mode<synchronous>, transform_indices = @transform_5, window_bounds = array<i64: 1, 128>}, {pipeline_mode = #tpu.pipeline_mode<synchronous>, transform_indices = @transform_6, window_bounds = array<i64: 1, 128>}, {transform_indices = @transform_7, window_bounds = array<i64: 1, 64, 128>}]} {
    %c0 = arith.constant 0 : index
    %c0_0 = arith.constant 0 : index
    %c0_1 = arith.constant 0 : index
    %0 = vector.load %arg2[%c0, %c0_0, %c0_1] : memref<1x64x128xbf16, #tpu.memory_space<vmem>>, vector<1x64x128xbf16>
    %1 = vector.shape_cast %0 : vector<1x64x128xbf16> to vector<64x128xbf16>
    %c0_2 = arith.constant 0 : index
    %c0_3 = arith.constant 0 : index
    %c0_4 = arith.constant 0 : index
    %2 = vector.load %arg3[%c0_2, %c0_3, %c0_4] : memref<1x128x160xbf16, #tpu.memory_space<vmem>>, vector<1x128x160xbf16>
    %3 = vector.shape_cast %2 : vector<1x128x160xbf16> to vector<128x160xbf16>
    %cst = arith.constant dense<0.000000e+00> : vector<64x160xf32>
    %4 = tpu.matmul %1, %3, %cst {dimension_numbers = #tpu.dot_dimension_numbers<[1], [0], [0], [1], [0, 0, 1, 1], [], []>} : vector<64x128xbf16>, vector<128x160xbf16>, vector<64x160xf32> -> vector<64x160xf32>
    %5 = vector.extract_strided_slice %4 {offsets = [0, 0], sizes = [64, 128], strides = [1, 1]} : vector<64x160xf32> to vector<64x128xf32>
    %6 = vector.extract_strided_slice %4 {offsets = [0, 128], sizes = [64, 32], strides = [1, 1]} : vector<64x160xf32> to vector<64x32xf32>
    %cst_5 = arith.constant dense<0xFF800000> : vector<64xf32>
    %7 = vector.multi_reduction <maximumf>, %6, %cst_5 [1] : vector<64x32xf32> to vector<64xf32>
    %8 = vector.shape_cast %7 : vector<64xf32> to vector<64x1xf32>
    %9 = vector.broadcast %8 : vector<64x1xf32> to vector<64x32xf32>
    %10 = arith.subf %6, %9 : vector<64x32xf32>
    %11 = math.exp %10 : vector<64x32xf32>
    %12 = arith.truncf %11 : vector<64x32xf32> to vector<64x32xbf16>
    %c0_6 = arith.constant 0 : index
    %c0_7 = arith.constant 0 : index
    %13 = vector.load %arg5[%c0_6, %c0_7] : memref<32x128xbf16, #tpu.memory_space<vmem>>, vector<32x128xbf16>
    %cst_8 = arith.constant dense<0.000000e+00> : vector<64x128xf32>
    %14 = tpu.matmul %12, %13, %cst_8 {dimension_numbers = #tpu.dot_dimension_numbers<[1], [0], [0], [1], [0, 0, 1, 1], [], []>} : vector<64x32xbf16>, vector<32x128xbf16>, vector<64x128xf32> -> vector<64x128xf32>
    %c0_9 = arith.constant 0 : index
    %c0_10 = arith.constant 0 : index
    %c0_11 = arith.constant 0 : index
    %15 = vector.load %arg4[%c0_9, %c0_10, %c0_11] : memref<1x32x128xbf16, #tpu.memory_space<vmem>>, vector<1x32x128xbf16>
    %16 = vector.shape_cast %15 : vector<1x32x128xbf16> to vector<32x128xbf16>
    %cst_12 = arith.constant dense<0.000000e+00> : vector<64x128xf32>
    %17 = tpu.matmul %12, %16, %cst_12 {dimension_numbers = #tpu.dot_dimension_numbers<[1], [0], [0], [1], [0, 0, 1, 1], [], []>} : vector<64x32xbf16>, vector<32x128xbf16>, vector<64x128xf32> -> vector<64x128xf32>
    %cst_13 = arith.constant 1.000000e-30 : f32
    %18 = vector.broadcast %cst_13 : f32 to vector<64x128xf32>
    %19 = arith.maximumf %14, %18 : vector<64x128xf32>
    %20 = tpu.reciprocal %19 {approx = true} : vector<64x128xf32> -> vector<64x128xf32>
    %21 = arith.mulf %17, %20 : vector<64x128xf32>
    %22 = arith.addf %21, %5 : vector<64x128xf32>
    %cst_14 = arith.constant dense<0.000000e+00> : vector<64xf32>
    %23 = vector.multi_reduction <add>, %22, %cst_14 [1] : vector<64x128xf32> to vector<64xf32>
    %24 = vector.shape_cast %23 : vector<64xf32> to vector<64x1xf32>
    %cst_15 = arith.constant 1.562500e-02 : f32
    %25 = vector.broadcast %cst_15 : f32 to vector<64x1xf32>
    %26 = arith.mulf %24, %25 : vector<64x1xf32>
    %27 = arith.mulf %22, %22 : vector<64x128xf32>
    %cst_16 = arith.constant dense<0.000000e+00> : vector<64xf32>
    %28 = vector.multi_reduction <add>, %27, %cst_16 [1] : vector<64x128xf32> to vector<64xf32>
    %29 = vector.shape_cast %28 : vector<64xf32> to vector<64x1xf32>
    %cst_17 = arith.constant 1.562500e-02 : f32
    %30 = vector.broadcast %cst_17 : f32 to vector<64x1xf32>
    %31 = arith.mulf %29, %30 : vector<64x1xf32>
    %32 = arith.mulf %26, %26 : vector<64x1xf32>
    %33 = arith.subf %31, %32 : vector<64x1xf32>
    %cst_18 = arith.constant 0.000000e+00 : f32
    %34 = vector.broadcast %cst_18 : f32 to vector<64x1xf32>
    %35 = arith.maximumf %33, %34 : vector<64x1xf32>
    %36 = vector.broadcast %26 : vector<64x1xf32> to vector<64x128xf32>
    %37 = arith.subf %22, %36 : vector<64x128xf32>
    %cst_19 = arith.constant 9.99999997E-7 : f32
    %38 = vector.broadcast %cst_19 : f32 to vector<64x1xf32>
    %39 = arith.addf %35, %38 : vector<64x1xf32>
    %40 = math.rsqrt %39 : vector<64x1xf32>
    %41 = vector.broadcast %40 : vector<64x1xf32> to vector<64x128xf32>
    %42 = arith.mulf %37, %41 : vector<64x128xf32>
    %c0_20 = arith.constant 0 : index
    %c0_21 = arith.constant 0 : index
    %43 = vector.load %arg7[%c0_20, %c0_21] : memref<1x128xf32, #tpu.memory_space<vmem>>, vector<1x128xf32>
    %44 = vector.broadcast %43 : vector<1x128xf32> to vector<64x128xf32>
    %45 = arith.mulf %42, %44 : vector<64x128xf32>
    %c0_22 = arith.constant 0 : index
    %c0_23 = arith.constant 0 : index
    %46 = vector.load %arg8[%c0_22, %c0_23] : memref<1x128xf32, #tpu.memory_space<vmem>>, vector<1x128xf32>
    %47 = vector.broadcast %46 : vector<1x128xf32> to vector<64x128xf32>
    %48 = arith.addf %45, %47 : vector<64x128xf32>
    %49 = arith.truncf %48 : vector<64x128xf32> to vector<64x128xbf16>
    %c0_24 = arith.constant 0 : index
    %c0_25 = arith.constant 0 : index
    %50 = vector.load %arg6[%c0_24, %c0_25] : memref<128x128xbf16, #tpu.memory_space<vmem>>, vector<128x128xbf16>
    %cst_26 = arith.constant dense<0.000000e+00> : vector<64x128xf32>
    %51 = tpu.matmul %49, %50, %cst_26 {dimension_numbers = #tpu.dot_dimension_numbers<[1], [0], [0], [1], [0, 0, 1, 1], [], []>} : vector<64x128xbf16>, vector<128x128xbf16>, vector<64x128xf32> -> vector<64x128xf32>
    %52 = arith.truncf %51 : vector<64x128xf32> to vector<64x128xbf16>
    %c0_27 = arith.constant 0 : index
    %c0_28 = arith.constant 0 : index
    %c0_29 = arith.constant 0 : index
    %53 = vector.load %arg9[%c0_27, %c0_28, %c0_29] : memref<1x64x128xbf16, #tpu.memory_space<vmem>>, vector<1x64x128xbf16>
    %54 = vector.shape_cast %53 : vector<1x64x128xbf16> to vector<64x128xbf16>
    %55 = vector.shape_cast %52 : vector<64x128xbf16> to vector<1x64x128xbf16>
    tpu.vector_store %arg9[%c0_27, %c0_28, %c0_29], %55 {strides = array<i32>} : memref<1x64x128xbf16, #tpu.memory_space<vmem>>, vector<1x64x128xbf16>,
    return
  }
  func.func @transform_0(%arg0: i32, %arg1: i32) -> (i32, i32, i32) {
    %c0_i32 = arith.constant 0 : i32
    %c0_i32_0 = arith.constant 0 : i32
    return %arg0, %arg1, %c0_i32 : i32, i32, i32
  }
  func.func @transform_1(%arg0: i32, %arg1: i32) -> (i32, i32, i32) {
    %c0_i32 = arith.constant 0 : i32
    %c0_i32_0 = arith.constant 0 : i32
    %c0_i32_1 = arith.constant 0 : i32
    return %arg0, %c0_i32, %c0_i32_0 : i32, i32, i32
  }
  func.func @transform_2(%arg0: i32, %arg1: i32) -> (i32, i32, i32) {
    %c0_i32 = arith.constant 0 : i32
    %c0_i32_0 = arith.constant 0 : i32
    %c0_i32_1 = arith.constant 0 : i32
    return %arg0, %c0_i32, %c0_i32_0 : i32, i32, i32
  }
  func.func @transform_3(%arg0: i32, %arg1: i32) -> (i32, i32) {
    %c0_i32 = arith.constant 0 : i32
    %c0_i32_0 = arith.constant 0 : i32
    %c0_i32_1 = arith.constant 0 : i32
    return %c0_i32, %c0_i32_0 : i32, i32
  }
  func.func @transform_4(%arg0: i32, %arg1: i32) -> (i32, i32) {
    %c0_i32 = arith.constant 0 : i32
    %c0_i32_0 = arith.constant 0 : i32
    %c0_i32_1 = arith.constant 0 : i32
    return %c0_i32, %c0_i32_0 : i32, i32
  }
  func.func @transform_5(%arg0: i32, %arg1: i32) -> (i32, i32) {
    %c0_i32 = arith.constant 0 : i32
    %c0_i32_0 = arith.constant 0 : i32
    %c0_i32_1 = arith.constant 0 : i32
    return %c0_i32, %c0_i32_0 : i32, i32
  }
  func.func @transform_6(%arg0: i32, %arg1: i32) -> (i32, i32) {
    %c0_i32 = arith.constant 0 : i32
    %c0_i32_0 = arith.constant 0 : i32
    %c0_i32_1 = arith.constant 0 : i32
    return %c0_i32, %c0_i32_0 : i32, i32
  }
  func.func @transform_7(%arg0: i32, %arg1: i32) -> (i32, i32, i32) {
    %c0_i32 = arith.constant 0 : i32
    %c0_i32_0 = arith.constant 0 : i32
    return %arg0, %arg1, %c0_i32 : i32, i32, i32
  }
}

</mosaic_0001>

<llo_original>
// kernel: tpu_custom_call.1
$region0: #{tpu_custom_call.1}
  #allocation0 [shape = 'u32[]', space=smem, size = 0x4, offset = 0x4, fixed_abs, tag = 'smem constant byte address 0x4 - core index']
  #allocation1 [shape = 'u32[144,128]{1,0:T(1,128)}', space=vmem, size = 0x12000, scoped, tag = 'internal scratch']
  %s0 = inlined_call_operand.vmem [shape: bf16[2,64,128], index: 0, kind: input, shape index: {}]
  %s1 = inlined_call_operand.vmem [shape: bf16[2,128,160], index: 1, kind: input, shape index: {}]
  %s2 = inlined_call_operand.vmem [shape: bf16[2,32,128], index: 2, kind: input, shape index: {}]
  %s3 = inlined_call_operand.vmem [shape: bf16[32,128], index: 3, kind: input, shape index: {}]
  %s4 = inlined_call_operand.vmem [shape: bf16[128,128], index: 4, kind: input, shape index: {}]
  %s5 = inlined_call_operand.vmem [shape: f32[1,128], index: 5, kind: input, shape index: {}]
  %s6 = inlined_call_operand.vmem [shape: f32[1,128], index: 6, kind: input, shape index: {}]
  %s7 = inlined_call_operand.hbm [shape: bf16[2,64,128], index: 7, kind: output, shape index: {}]
  %s8 = sld [smem:[#allocation0]]
  $region61: #{tpu_custom_call.1} parent=0
    _
  %s10 = ssub.s32 1, %s8
  %s11 = scalar_select 0, %s10, %s8
  $region1: #{tpu_custom_call.1} parent=0
    #allocation2 [shape = 'u8[32768]{0}', space=vmem, size = 0x8000, scoped, tag = 'output window, operand 0']
    #allocation3 [shape = 's32[2]{0}', space=sflag, size = 0x8, scoped, tag = 'scoped memory for tpu_custom_call.1']
    %12 = vsyncpa [#allocation3], 0
    %s13 = scalar_lea.sflag [#allocation3], 1
    %14 = vsyncpa %s13, 0
    loop: start=0, step=1, limit=4
    $region2: #{tpu_custom_call.1} parent=1 // loop_pre_header
      _
    $region3: #{tpu_custom_call.1} parent=1 // loop_header
      %s16 = sphi 0, %s20
      %p17 = scmp.ge.s32.totalorder %s16, 4
      %s23 = sphi 0, %s35
      %s24 = sphi 0, %s31
      %s25 = sphi 0, %s23
      %s26 = sphi 0, %s24
      %s27 = sphi 0, %s25
      %s28 = sphi 0, %s26
      %s40 = sphi 0, %s42
      %s43 = sphi 0, %s40
      %s44 = sphi 0, %s43
      %s60 = sphi 0, %s44
      %s66 = sphi 0, %s68
      %s69 = sphi 0, %s66
      %s70 = sphi 0, %s69
      %s86 = sphi 0, %s70
      %s92 = sphi 0, %s94
      %s95 = sphi 0, %s92
      %s96 = sphi 0, %s95
      %s112 = sphi 0, %s96
      %s116 = sphi 0, %s116
      %s118 = sphi 0, %s116
      %s119 = sphi 0, %s118
      %s133 = sphi 0, %s119
      %s137 = sphi 0, %s137
      %s139 = sphi 0, %s137
      %s140 = sphi 0, %s139
      %s154 = sphi 0, %s140
      %s158 = sphi 0, %s158
      %s160 = sphi 0, %s158
      %s161 = sphi 0, %s160
      %s175 = sphi 0, %s161
      %s179 = sphi 0, %s179
      %s181 = sphi 0, %s179
      %s182 = sphi 0, %s181
      %s196 = sphi 0, %s182
      %s204 = sphi 0, %s206
      %s207 = sphi 0, %s204
      %s208 = sphi 0, %s207
      %s224 = sphi 0, %s208
    $region4: #{tpu_custom_call.1} parent=1 // loop_header_branch
      %19 = sbr.rel (%p17) target = $region8
    $region5: #{tpu_custom_call.1} parent=1 // loop_body
      %s21 = ssub.s32 %s16, 1
      %s22 = ssub.s32 %s16, 2
      %s29 = sadd.s32 1, %s24
      %p30 = scmp.ge.s32.totalorder %s29, 1
      %s31 = scalar_select %p30, 0, %s29
      %s32 = sadd.s32 1, %s23
      %s33 = scalar_select %p30, %s32, %s23
      %p34 = scmp.ge.s32.totalorder %s33, 2
      %s35 = scalar_select %p34, 0, %s33
      %s36 = ssub.s32 %s23, %s35
      %s37 = ssub.s32 %s24, %s31
      %s38 = sor.u32 %s36, %s37
      %p39 = scmp.eq.s32.totalorder %s38, 0
      %s41 = sadd.s32 %s40, 1
      %s42 = scalar_select %p39, %s40, %s41
      %p45 = pneg %p39
      %p46 = scmp.eq.s32.totalorder %s16, 1
      %p47 = por %p45, %p46
      %p48 = scmp.ne.s32.totalorder %s40, %s43
      %p49 = scmp.eq.s32.totalorder %s16, 0
      %p50 = por %p48, %p49
      %p51 = scmp.ne.s32.totalorder %s40, %s43
      %p52 = scmp.eq.s32.totalorder %s21, 1
      %p53 = por %p51, %p52
      %p54 = scmp.ne.s32.totalorder %s43, %s44
      %p55 = scmp.eq.s32.totalorder %s21, 0
      %p56 = por %p54, %p55
      %p57 = scmp.ne.s32.totalorder %s43, %s44
      %p58 = scmp.eq.s32.totalorder %s22, 1
      %p59 = por %p57, %p58
      %p61 = scmp.ne.s32.totalorder %s44, %s60
      %p62 = scmp.eq.s32.totalorder %s22, 0
      %p63 = por %p61, %p62
      %s64 = ssub.s32 %s23, %s35
      %p65 = scmp.eq.s32.totalorder %s64, 0
      %s67 = sadd.s32 %s66, 1
      %s68 = scalar_select %p65, %s66, %s67
      %p71 = pneg %p65
      %p72 = scmp.eq.s32.totalorder %s16, 1
      %p73 = por %p71, %p72
      %p74 = scmp.ne.s32.totalorder %s66, %s69
      %p75 = scmp.eq.s32.totalorder %s16, 0
      %p76 = por %p74, %p75
      %p77 = scmp.ne.s32.totalorder %s66, %s69
      %p78 = scmp.eq.s32.totalorder %s21, 1
      %p79 = por %p77, %p78
      %p80 = scmp.ne.s32.totalorder %s69, %s70
      %p81 = scmp.eq.s32.totalorder %s21, 0
      %p82 = por %p80, %p81
      %p83 = scmp.ne.s32.totalorder %s69, %s70
      %p84 = scmp.eq.s32.totalorder %s22, 1
      %p85 = por %p83, %p84
      %p87 = scmp.ne.s32.totalorder %s70, %s86
      %p88 = scmp.eq.s32.totalorder %s22, 0
      %p89 = por %p87, %p88
      %s90 = ssub.s32 %s23, %s35
      %p91 = scmp.eq.s32.totalorder %s90, 0
      %s93 = sadd.s32 %s92, 1
      %s94 = scalar_select %p91, %s92, %s93
      %p97 = pneg %p91
      %p98 = scmp.eq.s32.totalorder %s16, 1
      %p99 = por %p97, %p98
      %p100 = scmp.ne.s32.totalorder %s92, %s95
      %p101 = scmp.eq.s32.totalorder %s16, 0
      %p102 = por %p100, %p101
      %p103 = scmp.ne.s32.totalorder %s92, %s95
      %p104 = scmp.eq.s32.totalorder %s21, 1
      %p105 = por %p103, %p104
      %p106 = scmp.ne.s32.totalorder %s95, %s96
      %p107 = scmp.eq.s32.totalorder %s21, 0
      %p108 = por %p106, %p107
      %p109 = scmp.ne.s32.totalorder %s95, %s96
      %p110 = scmp.eq.s32.totalorder %s22, 1
      %p111 = por %p109, %p110
      %p113 = scmp.ne.s32.totalorder %s96, %s112
      %p114 = scmp.eq.s32.totalorder %s22, 0
      %p115 = por %p113, %p114
      %s117 = sadd.s32 %s116, 1
      %p120 = scmp.eq.s32.totalorder %s16, 1
      %p121 = scmp.ne.s32.totalorder %s116, %s118
      %p122 = scmp.eq.s32.totalorder %s16, 0
      %p123 = por %p121, %p122
      %p124 = scmp.ne.s32.totalorder %s116, %s118
      %p125 = scmp.eq.s32.totalorder %s21, 1
      %p126 = por %p124, %p125
      %p127 = scmp.ne.s32.totalorder %s118, %s119
      %p128 = scmp.eq.s32.totalorder %s21, 0
      %p129 = por %p127, %p128
      %p130 = scmp.ne.s32.totalorder %s118, %s119
      %p131 = scmp.eq.s32.totalorder %s22, 1
      %p132 = por %p130, %p131
      %p134 = scmp.ne.s32.totalorder %s119, %s133
      %p135 = scmp.eq.s32.totalorder %s22, 0
      %p136 = por %p134, %p135
      %s138 = sadd.s32 %s137, 1
      %p141 = scmp.eq.s32.totalorder %s16, 1
      %p142 = scmp.ne.s32.totalorder %s137, %s139
      %p143 = scmp.eq.s32.totalorder %s16, 0
      %p144 = por %p142, %p143
      %p145 = scmp.ne.s32.totalorder %s137, %s139
      %p146 = scmp.eq.s32.totalorder %s21, 1
      %p147 = por %p145, %p146
      %p148 = scmp.ne.s32.totalorder %s139, %s140
      %p149 = scmp.eq.s32.totalorder %s21, 0
      %p150 = por %p148, %p149
      %p151 = scmp.ne.s32.totalorder %s139, %s140
      %p152 = scmp.eq.s32.totalorder %s22, 1
      %p153 = por %p151, %p152
      %p155 = scmp.ne.s32.totalorder %s140, %s154
      %p156 = scmp.eq.s32.totalorder %s22, 0
      %p157 = por %p155, %p156
      %s159 = sadd.s32 %s158, 1
      %p162 = scmp.eq.s32.totalorder %s16, 1
      %p163 = scmp.ne.s32.totalorder %s158, %s160
      %p164 = scmp.eq.s32.totalorder %s16, 0
      %p165 = por %p163, %p164
      %p166 = scmp.ne.s32.totalorder %s158, %s160
      %p167 = scmp.eq.s32.totalorder %s21, 1
      %p168 = por %p166, %p167
      %p169 = scmp.ne.s32.totalorder %s160, %s161
      %p170 = scmp.eq.s32.totalorder %s21, 0
      %p171 = por %p169, %p170
      %p172 = scmp.ne.s32.totalorder %s160, %s161
      %p173 = scmp.eq.s32.totalorder %s22, 1
      %p174 = por %p172, %p173
      %p176 = scmp.ne.s32.totalorder %s161, %s175
      %p177 = scmp.eq.s32.totalorder %s22, 0
      %p178 = por %p176, %p177
      %s180 = sadd.s32 %s179, 1
      %p183 = scmp.eq.s32.totalorder %s16, 1
      %p184 = scmp.ne.s32.totalorder %s179, %s181
      %p185 = scmp.eq.s32.totalorder %s16, 0
      %p186 = por %p184, %p185
      %p187 = scmp.ne.s32.totalorder %s179, %s181
      %p188 = scmp.eq.s32.totalorder %s21, 1
      %p189 = por %p187, %p188
      %p190 = scmp.ne.s32.totalorder %s181, %s182
      %p191 = scmp.eq.s32.totalorder %s21, 0
      %p192 = por %p190, %p191
      %p193 = scmp.ne.s32.totalorder %s181, %s182
      %p194 = scmp.eq.s32.totalorder %s22, 1
      %p195 = por %p193, %p194
      %p197 = scmp.ne.s32.totalorder %s182, %s196
      %p198 = scmp.eq.s32.totalorder %s22, 0
      %p199 = por %p197, %p198
      %s200 = ssub.s32 %s23, %s35
      %s201 = ssub.s32 %s24, %s31
      %s202 = sor.u32 %s200, %s201
      %p203 = scmp.eq.s32.totalorder %s202, 0
      %s205 = sadd.s32 %s204, 1
      %s206 = scalar_select %p203, %s204, %s205
      %p209 = pneg %p203
      %p210 = scmp.eq.s32.totalorder %s16, 1
      %p211 = por %p209, %p210
      %p212 = scmp.ne.s32.totalorder %s204, %s207
      %p213 = scmp.eq.s32.totalorder %s16, 0
      %p214 = por %p212, %p213
      %p215 = scmp.ne.s32.totalorder %s204, %s207
      %p216 = scmp.eq.s32.totalorder %s21, 1
      %p217 = por %p215, %p216
      %p218 = scmp.ne.s32.totalorder %s207, %s208
      %p219 = scmp.eq.s32.totalorder %s21, 0
      %p220 = por %p218, %p219
      %p221 = scmp.ne.s32.totalorder %s207, %s208
      %p222 = scmp.eq.s32.totalorder %s22, 1
      %p223 = por %p221, %p222
      %p225 = scmp.ne.s32.totalorder %s208, %s224
      %p226 = scmp.eq.s32.totalorder %s22, 0
      %p227 = por %p225, %p226
      %p228 = scmp.le.s32.totalorder 1, %s16
      %p229 = scmp.lt.s32.totalorder %s16, 3
      %p230 = pnand %p228, %p229
      %p231 = pneg %p230
      // Predicated region
      $region9: #{tpu_custom_call.1} parent=5 // pred_check
        _
      $region10: #{tpu_custom_call.1} parent=5 // pred_check_branch
        %233 = sbr.rel (%p230) target = $region12
      $region11: #{tpu_custom_call.1} parent=5 // pred_region
        %s234 = ssub.s32 %s16, 1
        // Predicated region
        $region13: #{tpu_custom_call.1} parent=11 // pred_check
          %p235 = pneg %p129
        $region14: #{tpu_custom_call.1} parent=11 // pred_check_branch
          %237 = sbr.rel (%p235) target = $region16
        $region15: #{tpu_custom_call.1} parent=11 // pred_region
          _
        $region16: #{tpu_custom_call.1} parent=11 // pred_fallthru
          _
        // Predicated region
        $region17: #{tpu_custom_call.1} parent=11 // pred_check
          %p238 = pneg %p150
        $region18: #{tpu_custom_call.1} parent=11 // pred_check_branch
          %240 = sbr.rel (%p238) target = $region20
        $region19: #{tpu_custom_call.1} parent=11 // pred_region
          _
        $region20: #{tpu_custom_call.1} parent=11 // pred_fallthru
          _
        // Predicated region
        $region21: #{tpu_custom_call.1} parent=11 // pred_check
          %p241 = pneg %p171
        $region22: #{tpu_custom_call.1} parent=11 // pred_check_branch
          %243 = sbr.rel (%p241) target = $region24
        $region23: #{tpu_custom_call.1} parent=11 // pred_region
          _
        $region24: #{tpu_custom_call.1} parent=11 // pred_fallthru
          _
        // Predicated region
        $region25: #{tpu_custom_call.1} parent=11 // pred_check
          %p244 = pneg %p192
        $region26: #{tpu_custom_call.1} parent=11 // pred_check_branch
          %246 = sbr.rel (%p244) target = $region28
        $region27: #{tpu_custom_call.1} parent=11 // pred_region
          _
        $region28: #{tpu_custom_call.1} parent=11 // pred_fallthru
          _
      $region12: #{tpu_custom_call.1} parent=5 // pred_fallthru
        _
      %p247 = scmp.lt.s32.totalorder %s16, 2
      // Predicated region
      $region29: #{tpu_custom_call.1} parent=5 // pred_check
        %p248 = pneg %p247
      $region30: #{tpu_custom_call.1} parent=5 // pred_check_branch
        %250 = sbr.rel (%p248) target = $region32
      $region31: #{tpu_custom_call.1} parent=5 // pred_region
        // Predicated region
        $region33: #{tpu_custom_call.1} parent=31 // pred_check
          %p251 = pneg %p50
        $region34: #{tpu_custom_call.1} parent=31 // pred_check_branch
          %253 = sbr.rel (%p251) target = $region36
        $region35: #{tpu_custom_call.1} parent=31 // pred_region
          %s254 = smul.u32 8, %s24
          %p255 = scmp.lt.s32.totalorder %s23, 1
          %s256 = scalar_select %p255, %s23, 1
          %p257 = scmp.lt.s32.totalorder %s254, 7
          %s258 = scalar_select %p257, %s254, 7
          %s259 = smul.addr %s256, 8
          %s260 = sadd.s32 %s258, %s259
          %s261 = smul.addr %s260, 4
          %s262 = scalar_lea.vmem %s0, %s261
          %s263 = smul.u32 8, %s24
        $region36: #{tpu_custom_call.1} parent=31 // pred_fallthru
          _
        // Predicated region
        $region37: #{tpu_custom_call.1} parent=31 // pred_check
          %p264 = pneg %p76
        $region38: #{tpu_custom_call.1} parent=31 // pred_check_branch
          %266 = sbr.rel (%p264) target = $region40
        $region39: #{tpu_custom_call.1} parent=31 // pred_region
          %p267 = scmp.lt.s32.totalorder %s23, 1
          %s268 = scalar_select %p267, %s23, 1
          %s269 = smul.addr %s268, 32
          %s270 = smul.addr %s269, 4
          %s271 = scalar_lea.vmem %s1, %s270
        $region40: #{tpu_custom_call.1} parent=31 // pred_fallthru
          _
        // Predicated region
        $region41: #{tpu_custom_call.1} parent=31 // pred_check
          %p272 = pneg %p102
        $region42: #{tpu_custom_call.1} parent=31 // pred_check_branch
          %274 = sbr.rel (%p272) target = $region44
        $region43: #{tpu_custom_call.1} parent=31 // pred_region
          %p275 = scmp.lt.s32.totalorder %s23, 1
          %s276 = scalar_select %p275, %s23, 1
          %s277 = smul.addr %s276, 4
          %s278 = smul.addr %s277, 4
          %s279 = scalar_lea.vmem %s2, %s278
        $region44: #{tpu_custom_call.1} parent=31 // pred_fallthru
          _
      $region32: #{tpu_custom_call.1} parent=5 // pred_fallthru
        _
      %p280 = scmp.le.s32.totalorder 1, %s16
      %p281 = scmp.lt.s32.totalorder %s16, 3
      %p282 = pnand %p280, %p281
      %p283 = pneg %p282
      // Predicated region
      $region45: #{tpu_custom_call.1} parent=5 // pred_check
        _
      $region46: #{tpu_custom_call.1} parent=5 // pred_check_branch
        %285 = sbr.rel (%p282) target = $region48
      $region47: #{tpu_custom_call.1} parent=5 // pred_region
        %s286 = ssub.s32 %s16, 1
        %s287 = smul.u32 8, %s26
        %p288 = scmp.lt.s32.totalorder %s25, 1
        %s289 = scalar_select %p288, %s25, 1
        %p290 = scmp.lt.s32.totalorder %s287, 7
        %s291 = scalar_select %p290, %s287, 7
        %s292 = smul.addr %s289, 8
        %s293 = sadd.s32 %s291, %s292
        %s294 = smul.addr %s293, 4
        %s295 = scalar_lea.vmem %s0, %s294
        %p296 = pneg %p56
        %p297 = pneg %p53
        %p298 = scmp.lt.s32.totalorder %s25, 1
        %s299 = scalar_select %p298, %s25, 1
        %s300 = smul.addr %s299, 32
        %s301 = smul.addr %s300, 4
        %s302 = scalar_lea.vmem %s1, %s301
        %p303 = pneg %p82
        %p304 = pneg %p79
        %p305 = scmp.lt.s32.totalorder %s25, 1
        %s306 = scalar_select %p305, %s25, 1
        %s307 = smul.addr %s306, 4
        %s308 = smul.addr %s307, 4
        %s309 = scalar_lea.vmem %s2, %s308
        %p310 = pneg %p108
        %p311 = pneg %p105
        %p312 = pneg %p129
        %p313 = pneg %p126
        %p314 = pneg %p150
        %p315 = pneg %p147
        %p316 = pneg %p171
        %p317 = pneg %p168
        %p318 = pneg %p192
        %p319 = pneg %p189
        %p320 = pneg %p220
        %p321 = pneg %p217
        %s322 = sand.u32 %s207, 1
        %s323 = scalar_lea.sflag [#allocation3], %s322
        %s324 = sand.u32 %s207, 1
        %s325 = smul.addr %s324, 32
        %s326 = scalar_lea.vmem [#allocation2], %s325
        %s327 = smul.u32 8, %s26
        %p328 = scmp.lt.s32.totalorder %s25, 1
        %s329 = scalar_select %p328, %s25, 1
        %p330 = scmp.lt.s32.totalorder %s327, 7
        %s331 = scalar_select %p330, %s327, 7
        %s332 = smul.addr %s329, 8
        %s333 = sadd.s32 %s331, %s332
        %s334 = smul.addr %s333, 4
        %s335 = scalar_lea.vmem %s0, %s334
        %s336 = smul.u32 8, %s26
        %p337 = scmp.lt.s32.totalorder %s25, 1
        %s338 = scalar_select %p337, %s25, 1
        %s339 = smul.addr %s338, 32
        %s340 = smul.addr %s339, 4
        %s341 = scalar_lea.vmem %s1, %s340
        %p342 = scmp.lt.s32.totalorder %s25, 1
        %s343 = scalar_select %p342, %s25, 1
        %s344 = smul.addr %s343, 4
        %s345 = smul.addr %s344, 4
        %s346 = scalar_lea.vmem %s2, %s345
        %s347 = smul.u32 8, %s26
        %v349 = vld [vmem:[%s335] sm:$0xf]
        %v350 = vld [vmem:[%s335 + $0x4] sm:$0xf]
        %v351 = vld [vmem:[%s335 + $0x8] sm:$0xf]
        %v352 = vld [vmem:[%s335 + $0xc] sm:$0xf]
        %v353 = vld [vmem:[%s335 + $0x10] sm:$0xf]
        %v354 = vld [vmem:[%s335 + $0x14] sm:$0xf]
        %v355 = vld [vmem:[%s335 + $0x18] sm:$0xf]
        %v356 = vld [vmem:[%s335 + $0x1c] sm:$0xf]
        %v357 = vld [vmem:[%s341] sm:$0xff]
        %v358 = vld [vmem:[%s341 + $0x8] sm:$0xff]
        %v359 = vld [vmem:[%s341 + $0x10] sm:$0xff]
        %v360 = vld [vmem:[%s341 + $0x18] sm:$0xff]
        %v361 = vld [vmem:[%s341 + $0x20] sm:$0xff]
        %v362 = vld [vmem:[%s341 + $0x28] sm:$0xff]
        %v363 = vld [vmem:[%s341 + $0x30] sm:$0xff]
        %v364 = vld [vmem:[%s341 + $0x38] sm:$0xff]
        %v365 = vld [vmem:[%s341 + $0x40] sm:$0xff]
        %v366 = vld [vmem:[%s341 + $0x48] sm:$0xff]
        %v367 = vld [vmem:[%s341 + $0x50] sm:$0xff]
        %v368 = vld [vmem:[%s341 + $0x58] sm:$0xff]
        %v369 = vld [vmem:[%s341 + $0x60] sm:$0xff]
        %v370 = vld [vmem:[%s341 + $0x68] sm:$0xff]
        %v371 = vld [vmem:[%s341 + $0x70] sm:$0xff]
        %v372 = vld [vmem:[%s341 + $0x78] sm:$0xff]
        %v381 = vunpack.c.l.b16 %v349
        %v382 = vunpack.c.l.b16 %v350
        %v383 = vunpack.c.l.b16 %v351
        %v384 = vunpack.c.l.b16 %v352
        %v385 = vunpack.c.l.b16 %v353
        %v386 = vunpack.c.l.b16 %v354
        %v387 = vunpack.c.l.b16 %v355
        %v388 = vunpack.c.l.b16 %v356
        %v389 = vpack.c.b16 %v382, %v381
        %v390 = vpack.c.b16 %v384, %v383
        %v391 = vpack.c.b16 %v386, %v385
        %v392 = vpack.c.b16 %v388, %v387
        %v413 = vunpack.c.l.b16 %v357
        %v414 = vunpack.c.h.b16 %v357
        %v415 = vunpack.c.l.b16 %v358
        %v416 = vunpack.c.h.b16 %v358
        %v417 = vunpack.c.l.b16 %v359
        %v418 = vunpack.c.h.b16 %v359
        %v419 = vunpack.c.l.b16 %v360
        %v420 = vunpack.c.h.b16 %v360
        %v421 = vunpack.c.l.b16 %v361
        %v422 = vunpack.c.h.b16 %v361
        %v423 = vunpack.c.l.b16 %v362
        %v424 = vunpack.c.h.b16 %v362
        %v425 = vunpack.c.l.b16 %v363
        %v426 = vunpack.c.h.b16 %v363
        %v427 = vunpack.c.l.b16 %v364
        %v428 = vunpack.c.h.b16 %v364
        %v429 = vunpack.c.l.b16 %v365
        %v430 = vunpack.c.h.b16 %v365
        %v431 = vunpack.c.l.b16 %v366
        %v432 = vunpack.c.h.b16 %v366
        %v433 = vunpack.c.l.b16 %v367
        %v434 = vunpack.c.h.b16 %v367
        %v435 = vunpack.c.l.b16 %v368
        %v436 = vunpack.c.h.b16 %v368
        %v437 = vunpack.c.l.b16 %v369
        %v438 = vunpack.c.h.b16 %v369
        %v439 = vunpack.c.l.b16 %v370
        %v440 = vunpack.c.h.b16 %v370
        %v441 = vunpack.c.l.b16 %v371
        %v442 = vunpack.c.h.b16 %v371
        %v443 = vunpack.c.l.b16 %v372
        %v444 = vunpack.c.h.b16 %v372
        %v445 = vpack.c.b16 %v415, %v413
        %v446 = vpack.c.b16 %v416, %v414
        %v447 = vpack.c.b16 %v419, %v417
        %v448 = vpack.c.b16 %v420, %v418
        %v449 = vpack.c.b16 %v423, %v421
        %v450 = vpack.c.b16 %v424, %v422
        %v451 = vpack.c.b16 %v427, %v425
        %v452 = vpack.c.b16 %v428, %v426
        %v453 = vpack.c.b16 %v431, %v429
        %v454 = vpack.c.b16 %v432, %v430
        %v455 = vpack.c.b16 %v435, %v433
        %v456 = vpack.c.b16 %v436, %v434
        %v457 = vpack.c.b16 %v439, %v437
        %v458 = vpack.c.b16 %v440, %v438
        %v459 = vpack.c.b16 %v443, %v441
        %v460 = vpack.c.b16 %v444, %v442
        %477 = vmatprep.subr.bf16.mxu0 %v446
        %478 = vmatpush1.bf16.msra.mxu0 %v445
        %479 = vmatprep.subr.bf16.mxu0 %v448
        %480 = vmatpush1.bf16.msra.mxu0 %v447
        %481 = vmatprep.subr.bf16.mxu0 %v450
        %482 = vmatpush1.bf16.msra.mxu0 %v449
        %483 = vmatprep.subr.bf16.mxu0 %v452
        %484 = vmatpush1.bf16.msra.mxu0 %v451
        %485 = vmatprep.subr.bf16.mxu0 %v454
        %486 = vmatpush1.bf16.msra.mxu0 %v453
        %487 = vmatprep.subr.bf16.mxu0 %v456
        %488 = vmatpush1.bf16.msra.mxu0 %v455
        %489 = vmatprep.subr.bf16.mxu0 %v458
        %490 = vmatpush1.bf16.msra.mxu0 %v457
        %491 = vmatprep.subr.bf16.mxu0 %v460
        %492 = vmatpush1.bf16.msra.mxu0 %v459
        %493 = vmatprep.subr.bf16.mxu0 0
        %494 = vmatpush1.bf16.msra.mxu0 0
        %495 = vmatprep.subr.bf16.mxu0 0
        %496 = vmatpush1.bf16.msra.mxu0 0
        %497 = vmatprep.subr.bf16.mxu0 0
        %498 = vmatpush1.bf16.msra.mxu0 0
        %499 = vmatprep.subr.bf16.mxu0 0
        %500 = vmatpush1.bf16.msra.mxu0 0
        %501 = vmatprep.subr.bf16.mxu0 0
        %502 = vmatpush1.bf16.msra.mxu0 0
        %503 = vmatprep.subr.bf16.mxu0 0
        %504 = vmatpush1.bf16.msra.mxu0 0
        %505 = vmatprep.subr.bf16.mxu0 0
        %506 = vmatpush1.bf16.msra.mxu0 0
        %507 = vmatprep.subr.bf16.mxu0 0
        %508 = vmatpush1.bf16.msra.mxu0 0
        %509 = vmatprep.mubr.bf16.mxu0 0
        %510 = vmatmul.mubr.bf16.gmra.mrb[0].mxu0 %v389
        %v511 = vpop.f32.mrb[0].mxu0
        %v512 = vadd.f32 0.0, %v511
        %v513 = vpop.f32.mrb[0].mxu0
        %v514 = vadd.f32 0.0, %v513
        %v515 = vpop.f32.mrb[0].mxu0
        %v516 = vadd.f32 0.0, %v515
        %v517 = vpop.f32.mrb[0].mxu0
        %v518 = vadd.f32 0.0, %v517
        %519 = vmatprep.mubr.bf16.mxu0 0
        %520 = vmatmul.mubr.bf16.gmra.mrb[0].mxu0 %v390
        %v521 = vpop.f32.mrb[0].mxu0
        %v522 = vadd.f32 0.0, %v521
        %v523 = vpop.f32.mrb[0].mxu0
        %v524 = vadd.f32 0.0, %v523
        %v525 = vpop.f32.mrb[0].mxu0
        %v526 = vadd.f32 0.0, %v525
        %v527 = vpop.f32.mrb[0].mxu0
        %v528 = vadd.f32 0.0, %v527
        %529 = vmatprep.mubr.bf16.mxu0 0
        %530 = vmatmul.mubr.bf16.gmra.mrb[0].mxu0 %v391
        %v531 = vpop.f32.mrb[0].mxu0
        %v532 = vadd.f32 0.0, %v531
        %v533 = vpop.f32.mrb[0].mxu0
        %v534 = vadd.f32 0.0, %v533
        %v535 = vpop.f32.mrb[0].mxu0
        %v536 = vadd.f32 0.0, %v535
        %v537 = vpop.f32.mrb[0].mxu0
        %v538 = vadd.f32 0.0, %v537
        %539 = vmatprep.mubr.bf16.mxu0 0
        %540 = vmatmul.mubr.bf16.gmra.mrb[0].mxu0 %v392
        %v541 = vpop.f32.mrb[0].mxu0
        %v542 = vadd.f32 0.0, %v541
        %v543 = vpop.f32.mrb[0].mxu0
        %v544 = vadd.f32 0.0, %v543
        %v545 = vpop.f32.mrb[0].mxu0
        %v546 = vadd.f32 0.0, %v545
        %v547 = vpop.f32.mrb[0].mxu0
        %v548 = vadd.f32 0.0, %v547
        %549 = vdwg.mxu0
        %vm550 = vcmask 261120
        %v551 = vsel %vm550, %v514, -inf
        %552 = vmax.xlane.f32.xlu0 %v551
        %v553 = vpop.xlane.xlu0 %552
        %v554 = vsel %vm550, %v518, -inf
        %555 = vmax.xlane.f32.xlu0 %v554
        %v556 = vpop.xlane.xlu0 %555
        %v557 = vsel %vm550, %v524, -inf
        %558 = vmax.xlane.f32.xlu0 %v557
        %v559 = vpop.xlane.xlu0 %558
        %v560 = vsel %vm550, %v528, -inf
        %561 = vmax.xlane.f32.xlu0 %v560
        %v562 = vpop.xlane.xlu0 %561
        %v563 = vsel %vm550, %v534, -inf
        %564 = vmax.xlane.f32.xlu0 %v563
        %v565 = vpop.xlane.xlu0 %564
        %v566 = vsel %vm550, %v538, -inf
        %567 = vmax.xlane.f32.xlu0 %v566
        %v568 = vpop.xlane.xlu0 %567
        %v569 = vsel %vm550, %v544, -inf
        %570 = vmax.xlane.f32.xlu0 %v569
        %v571 = vpop.xlane.xlu0 %570
        %v572 = vsel %vm550, %v548, -inf
        %573 = vmax.xlane.f32.xlu0 %v572
        %v574 = vpop.xlane.xlu0 %573
        %v575 = vsub.f32 %v514, %v553
        %v576 = vsub.f32 %v518, %v556
        %v577 = vsub.f32 %v524, %v559
        %v578 = vsub.f32 %v528, %v562
        %v579 = vsub.f32 %v534, %v565
        %v580 = vsub.f32 %v538, %v568
        %v581 = vsub.f32 %v544, %v571
        %v582 = vsub.f32 %v548, %v574
        %v583 = vmul.f32 %v575, 1.442695
        %v584 = vpow.pop %v583
        %v585 = vmul.f32 %v576, 1.442695
        %v586 = vpow.pop %v585
        %v587 = vmul.f32 %v577, 1.442695
        %v588 = vpow.pop %v587
        %v589 = vmul.f32 %v578, 1.442695
        %v590 = vpow.pop %v589
        %v591 = vmul.f32 %v579, 1.442695
        %v592 = vpow.pop %v591
        %v593 = vmul.f32 %v580, 1.442695
        %v594 = vpow.pop %v593
        %v595 = vmul.f32 %v581, 1.442695
        %v596 = vpow.pop %v595
        %v597 = vmul.f32 %v582, 1.442695
        %v598 = vpow.pop %v597
        %v599 = vpack.c.bf16 %v586, %v584
        %v600 = vpack.c.bf16 %v590, %v588
        %v601 = vpack.c.bf16 %v594, %v592
        %v602 = vpack.c.bf16 %v598, %v596
        %v603 = vld [vmem:[%s3] sm:$0xf]
        %v604 = vld [vmem:[%s3 + $0x4] sm:$0xf]
        %v605 = vld [vmem:[%s3 + $0x8] sm:$0xf]
        %v606 = vld [vmem:[%s3 + $0xc] sm:$0xf]
        %v611 = vunpack.c.l.b16 %v603
        %v612 = vunpack.c.l.b16 %v604
        %v613 = vunpack.c.l.b16 %v605
        %v614 = vunpack.c.l.b16 %v606
        %v615 = vpack.c.b16 %v612, %v611
        %v616 = vpack.c.b16 %v614, %v613
        %v620 = vsel %vm550, %v599, 0
        %v623 = vsel %vm550, %v600, 0
        %v626 = vsel %vm550, %v601, 0
        %v629 = vsel %vm550, %v602, 0
        %631 = vmatprep.subr.bf16.mxu0 0
        %632 = vmatpush1.bf16.msra.mxu0 %v615
        %633 = vmatprep.subr.bf16.mxu0 0
        %634 = vmatpush1.bf16.msra.mxu0 %v616
        %635 = vmatprep.subr.bf16.mxu0 0
        %636 = vmatpush1.bf16.msra.mxu0 0
        %637 = vmatprep.subr.bf16.mxu0 0
        %638 = vmatpush1.bf16.msra.mxu0 0
        %639 = vmatprep.subr.bf16.mxu0 0
        %640 = vmatpush1.bf16.msra.mxu0 0
        %641 = vmatprep.subr.bf16.mxu0 0
        %642 = vmatpush1.bf16.msra.mxu0 0
        %643 = vmatprep.subr.bf16.mxu0 0
        %644 = vmatpush1.bf16.msra.mxu0 0
        %645 = vmatprep.subr.bf16.mxu0 0
        %646 = vmatpush1.bf16.msra.mxu0 0
        %647 = vmatprep.subr.bf16.mxu0 0
        %648 = vmatpush1.bf16.msra.mxu0 0
        %649 = vmatprep.subr.bf16.mxu0 0
        %650 = vmatpush1.bf16.msra.mxu0 0
        %651 = vmatprep.subr.bf16.mxu0 0
        %652 = vmatpush1.bf16.msra.mxu0 0
        %653 = vmatprep.subr.bf16.mxu0 0
        %654 = vmatpush1.bf16.msra.mxu0 0
        %655 = vmatprep.subr.bf16.mxu0 0
        %656 = vmatpush1.bf16.msra.mxu0 0
        %657 = vmatprep.subr.bf16.mxu0 0
        %658 = vmatpush1.bf16.msra.mxu0 0
        %659 = vmatprep.subr.bf16.mxu0 0
        %660 = vmatpush1.bf16.msra.mxu0 0
        %661 = vmatprep.subr.bf16.mxu0 0
        %662 = vmatpush1.bf16.msra.mxu0 0
        %663 = vmatprep.mubr.bf16.mxu0 0
        %664 = vmatmul.mubr.bf16.gmra.mrb[0].mxu0 %v620
        %v665 = vpop.f32.mrb[0].mxu0
        %v666 = vadd.f32 0.0, %v665
        %v667 = vpop.f32.mrb[0].mxu0
        %v668 = vpop.f32.mrb[0].mxu0
        %v669 = vadd.f32 0.0, %v668
        %v670 = vpop.f32.mrb[0].mxu0
        %671 = vmatprep.mubr.bf16.mxu0 0
        %672 = vmatmul.mubr.bf16.gmra.mrb[0].mxu0 %v623
        %v673 = vpop.f32.mrb[0].mxu0
        %v674 = vadd.f32 0.0, %v673
        %v675 = vpop.f32.mrb[0].mxu0
        %v676 = vpop.f32.mrb[0].mxu0
        %v677 = vadd.f32 0.0, %v676
        %v678 = vpop.f32.mrb[0].mxu0
        %679 = vmatprep.mubr.bf16.mxu0 0
        %680 = vmatmul.mubr.bf16.gmra.mrb[0].mxu0 %v626
        %v681 = vpop.f32.mrb[0].mxu0
        %v682 = vadd.f32 0.0, %v681
        %v683 = vpop.f32.mrb[0].mxu0
        %v684 = vpop.f32.mrb[0].mxu0
        %v685 = vadd.f32 0.0, %v684
        %v686 = vpop.f32.mrb[0].mxu0
        %687 = vmatprep.mubr.bf16.mxu0 0
        %688 = vmatmul.mubr.bf16.gmra.mrb[0].mxu0 %v629
        %v689 = vpop.f32.mrb[0].mxu0
        %v690 = vadd.f32 0.0, %v689
        %v691 = vpop.f32.mrb[0].mxu0
        %v692 = vpop.f32.mrb[0].mxu0
        %v693 = vadd.f32 0.0, %v692
        %v694 = vpop.f32.mrb[0].mxu0
        %695 = vdwg.mxu0
        %v696 = vld [vmem:[%s346] sm:$0xf]
        %v697 = vld [vmem:[%s346 + $0x4] sm:$0xf]
        %v698 = vld [vmem:[%s346 + $0x8] sm:$0xf]
        %v699 = vld [vmem:[%s346 + $0xc] sm:$0xf]
        %v704 = vunpack.c.l.b16 %v696
        %v705 = vunpack.c.l.b16 %v697
        %v706 = vunpack.c.l.b16 %v698
        %v707 = vunpack.c.l.b16 %v699
        %v708 = vpack.c.b16 %v705, %v704
        %v709 = vpack.c.b16 %v707, %v706
        %712 = vmatprep.subr.bf16.mxu0 0
        %713 = vmatpush1.bf16.msra.mxu0 %v708
        %714 = vmatprep.subr.bf16.mxu0 0
        %715 = vmatpush1.bf16.msra.mxu0 %v709
        %716 = vmatprep.subr.bf16.mxu0 0
        %717 = vmatpush1.bf16.msra.mxu0 0
        %718 = vmatprep.subr.bf16.mxu0 0
        %719 = vmatpush1.bf16.msra.mxu0 0
        %720 = vmatprep.subr.bf16.mxu0 0
        %721 = vmatpush1.bf16.msra.mxu0 0
        %722 = vmatprep.subr.bf16.mxu0 0
        %723 = vmatpush1.bf16.msra.mxu0 0
        %724 = vmatprep.subr.bf16.mxu0 0
        %725 = vmatpush1.bf16.msra.mxu0 0
        %726 = vmatprep.subr.bf16.mxu0 0
        %727 = vmatpush1.bf16.msra.mxu0 0
        %728 = vmatprep.subr.bf16.mxu0 0
        %729 = vmatpush1.bf16.msra.mxu0 0
        %730 = vmatprep.subr.bf16.mxu0 0
        %731 = vmatpush1.bf16.msra.mxu0 0
        %732 = vmatprep.subr.bf16.mxu0 0
        %733 = vmatpush1.bf16.msra.mxu0 0
        %734 = vmatprep.subr.bf16.mxu0 0
        %735 = vmatpush1.bf16.msra.mxu0 0
        %736 = vmatprep.subr.bf16.mxu0 0
        %737 = vmatpush1.bf16.msra.mxu0 0
        %738 = vmatprep.subr.bf16.mxu0 0
        %739 = vmatpush1.bf16.msra.mxu0 0
        %740 = vmatprep.subr.bf16.mxu0 0
        %741 = vmatpush1.bf16.msra.mxu0 0
        %742 = vmatprep.subr.bf16.mxu0 0
        %743 = vmatpush1.bf16.msra.mxu0 0
        %744 = vmatprep.mubr.bf16.mxu0 0
        %745 = vmatmul.mubr.bf16.gmra.mrb[0].mxu0 %v620
        %v746 = vpop.f32.mrb[0].mxu0
        %v747 = vadd.f32 0.0, %v746
        %v748 = vpop.f32.mrb[0].mxu0
        %v749 = vpop.f32.mrb[0].mxu0
        %v750 = vadd.f32 0.0, %v749
        %v751 = vpop.f32.mrb[0].mxu0
        %752 = vmatprep.mubr.bf16.mxu0 0
        %753 = vmatmul.mubr.bf16.gmra.mrb[0].mxu0 %v623
        %v754 = vpop.f32.mrb[0].mxu0
        %v755 = vadd.f32 0.0, %v754
        %v756 = vpop.f32.mrb[0].mxu0
        %v757 = vpop.f32.mrb[0].mxu0
        %v758 = vadd.f32 0.0, %v757
        %v759 = vpop.f32.mrb[0].mxu0
        %760 = vmatprep.mubr.bf16.mxu0 0
        %761 = vmatmul.mubr.bf16.gmra.mrb[0].mxu0 %v626
        %v762 = vpop.f32.mrb[0].mxu0
        %v763 = vadd.f32 0.0, %v762
        %v764 = vpop.f32.mrb[0].mxu0
        %v765 = vpop.f32.mrb[0].mxu0
        %v766 = vadd.f32 0.0, %v765
        %v767 = vpop.f32.mrb[0].mxu0
        %768 = vmatprep.mubr.bf16.mxu0 0
        %769 = vmatmul.mubr.bf16.gmra.mrb[0].mxu0 %v629
        %v770 = vpop.f32.mrb[0].mxu0
        %v771 = vadd.f32 0.0, %v770
        %v772 = vpop.f32.mrb[0].mxu0
        %v773 = vpop.f32.mrb[0].mxu0
        %v774 = vadd.f32 0.0, %v773
        %v775 = vpop.f32.mrb[0].mxu0
        %776 = vdwg.mxu0
        %v777 = vmax.f32 %v666, 1e-30
        %v778 = vmax.f32 %v669, 1e-30
        %v779 = vmax.f32 %v674, 1e-30
        %v780 = vmax.f32 %v677, 1e-30
        %v781 = vmax.f32 %v682, 1e-30
        %v782 = vmax.f32 %v685, 1e-30
        %v783 = vmax.f32 %v690, 1e-30
        %v784 = vmax.f32 %v693, 1e-30
        %v785 = vrcp.pop %v777
        %v786 = vrcp.pop %v778
        %v787 = vrcp.pop %v779
        %v788 = vrcp.pop %v780
        %v789 = vrcp.pop %v781
        %v790 = vrcp.pop %v782
        %v791 = vrcp.pop %v783
        %v792 = vrcp.pop %v784
        %v793 = vmul.f32 %v747, %v785
        %v794 = vmul.f32 %v750, %v786
        %v795 = vmul.f32 %v755, %v787
        %v796 = vmul.f32 %v758, %v788
        %v797 = vmul.f32 %v763, %v789
        %v798 = vmul.f32 %v766, %v790
        %v799 = vmul.f32 %v771, %v791
        %v800 = vmul.f32 %v774, %v792
        %v801 = vadd.f32 %v793, %v512
        %v802 = vadd.f32 %v794, %v516
        %v803 = vadd.f32 %v795, %v522
        %v804 = vadd.f32 %v796, %v526
        %v805 = vadd.f32 %v797, %v532
        %v806 = vadd.f32 %v798, %v536
        %v807 = vadd.f32 %v799, %v542
        %v808 = vadd.f32 %v800, %v546
        %809 = vadd.xlane.f32.xlu0 %v801
        %v810 = vpop.xlane.xlu0 %809
        %811 = vadd.xlane.f32.xlu0 %v802
        %v812 = vpop.xlane.xlu0 %811
        %813 = vadd.xlane.f32.xlu0 %v803
        %v814 = vpop.xlane.xlu0 %813
        %815 = vadd.xlane.f32.xlu0 %v804
        %v816 = vpop.xlane.xlu0 %815
        %817 = vadd.xlane.f32.xlu0 %v805
        %v818 = vpop.xlane.xlu0 %817
        %819 = vadd.xlane.f32.xlu0 %v806
        %v820 = vpop.xlane.xlu0 %819
        %821 = vadd.xlane.f32.xlu0 %v807
        %v822 = vpop.xlane.xlu0 %821
        %823 = vadd.xlane.f32.xlu0 %v808
        %v824 = vpop.xlane.xlu0 %823
        %v825 = vmul.f32 %v810, 0.015625
        %v826 = vmul.f32 %v812, 0.015625
        %v827 = vmul.f32 %v814, 0.015625
        %v828 = vmul.f32 %v816, 0.015625
        %v829 = vmul.f32 %v818, 0.015625
        %v830 = vmul.f32 %v820, 0.015625
        %v831 = vmul.f32 %v822, 0.015625
        %v832 = vmul.f32 %v824, 0.015625
        %v833 = vmul.f32 %v801, %v801
        %v834 = vmul.f32 %v802, %v802
        %v835 = vmul.f32 %v803, %v803
        %v836 = vmul.f32 %v804, %v804
        %v837 = vmul.f32 %v805, %v805
        %v838 = vmul.f32 %v806, %v806
        %v839 = vmul.f32 %v807, %v807
        %v840 = vmul.f32 %v808, %v808
        %841 = vadd.xlane.f32.xlu0 %v833
        %v842 = vpop.xlane.xlu0 %841
        %843 = vadd.xlane.f32.xlu0 %v834
        %v844 = vpop.xlane.xlu0 %843
        %845 = vadd.xlane.f32.xlu0 %v835
        %v846 = vpop.xlane.xlu0 %845
        %847 = vadd.xlane.f32.xlu0 %v836
        %v848 = vpop.xlane.xlu0 %847
        %849 = vadd.xlane.f32.xlu0 %v837
        %v850 = vpop.xlane.xlu0 %849
        %851 = vadd.xlane.f32.xlu0 %v838
        %v852 = vpop.xlane.xlu0 %851
        %853 = vadd.xlane.f32.xlu0 %v839
        %v854 = vpop.xlane.xlu0 %853
        %855 = vadd.xlane.f32.xlu0 %v840
        %v856 = vpop.xlane.xlu0 %855
        %v857 = vmul.f32 %v842, 0.015625
        %v858 = vmul.f32 %v844, 0.015625
        %v859 = vmul.f32 %v846, 0.015625
        %v860 = vmul.f32 %v848, 0.015625
        %v861 = vmul.f32 %v850, 0.015625
        %v862 = vmul.f32 %v852, 0.015625
        %v863 = vmul.f32 %v854, 0.015625
        %v864 = vmul.f32 %v856, 0.015625
        %v865 = vmul.f32 %v825, %v825
        %v866 = vmul.f32 %v826, %v826
        %v867 = vmul.f32 %v827, %v827
        %v868 = vmul.f32 %v828, %v828
        %v869 = vmul.f32 %v829, %v829
        %v870 = vmul.f32 %v830, %v830
        %v871 = vmul.f32 %v831, %v831
        %v872 = vmul.f32 %v832, %v832
        %v873 = vsub.f32 %v857, %v865
        %v874 = vsub.f32 %v858, %v866
        %v875 = vsub.f32 %v859, %v867
        %v876 = vsub.f32 %v860, %v868
        %v877 = vsub.f32 %v861, %v869
        %v878 = vsub.f32 %v862, %v870
        %v879 = vsub.f32 %v863, %v871
        %v880 = vsub.f32 %v864, %v872
        %v881 = vmax.f32 %v873, 0.0
        %v882 = vmax.f32 %v874, 0.0
        %v883 = vmax.f32 %v875, 0.0
        %v884 = vmax.f32 %v876, 0.0
        %v885 = vmax.f32 %v877, 0.0
        %v886 = vmax.f32 %v878, 0.0
        %v887 = vmax.f32 %v879, 0.0
        %v888 = vmax.f32 %v880, 0.0
        %v889 = vsub.f32 %v801, %v825
        %v890 = vsub.f32 %v802, %v826
        %v891 = vsub.f32 %v803, %v827
        %v892 = vsub.f32 %v804, %v828
        %v893 = vsub.f32 %v805, %v829
        %v894 = vsub.f32 %v806, %v830
        %v895 = vsub.f32 %v807, %v831
        %v896 = vsub.f32 %v808, %v832
        %v897 = vadd.f32 %v881, 1e-06
        %v898 = vadd.f32 %v882, 1e-06
        %v899 = vadd.f32 %v883, 1e-06
        %v900 = vadd.f32 %v884, 1e-06
        %v901 = vadd.f32 %v885, 1e-06
        %v902 = vadd.f32 %v886, 1e-06
        %v903 = vadd.f32 %v887, 1e-06
        %v904 = vadd.f32 %v888, 1e-06
        %v905 = vrsqrt.pop %v897
        %v906 = vrsqrt.pop %v898
        %v907 = vrsqrt.pop %v899
        %v908 = vrsqrt.pop %v900
        %v909 = vrsqrt.pop %v901
        %v910 = vrsqrt.pop %v902
        %v911 = vrsqrt.pop %v903
        %v912 = vrsqrt.pop %v904
        %v913 = vmul.f32 %v889, %v905
        %v914 = vmul.f32 %v890, %v906
        %v915 = vmul.f32 %v891, %v907
        %v916 = vmul.f32 %v892, %v908
        %v917 = vmul.f32 %v893, %v909
        %v918 = vmul.f32 %v894, %v910
        %v919 = vmul.f32 %v895, %v911
        %v920 = vmul.f32 %v896, %v912
        %v921 = vld [vmem:[%s5] sm:$0x1]
        %v923 = vlaneseq
        %v924 = vshrl.u32 %v923, 7
        %v925 = vsub.s32 0, %v924
        %v926 = vrot.slane %v921, %v925
        %v928 = vmul.f32 %v913, %v926
        %v929 = vmul.f32 %v914, %v926
        %v930 = vmul.f32 %v915, %v926
        %v931 = vmul.f32 %v916, %v926
        %v932 = vmul.f32 %v917, %v926
        %v933 = vmul.f32 %v918, %v926
        %v934 = vmul.f32 %v919, %v926
        %v935 = vmul.f32 %v920, %v926
        %v936 = vld [vmem:[%s6] sm:$0x1]
        %v938 = vlaneseq
        %v939 = vshrl.u32 %v938, 7
        %v940 = vsub.s32 0, %v939
        %v941 = vrot.slane %v936, %v940
        %v943 = vadd.f32 %v928, %v941
        %v944 = vadd.f32 %v929, %v941
        %v945 = vadd.f32 %v930, %v941
        %v946 = vadd.f32 %v931, %v941
        %v947 = vadd.f32 %v932, %v941
        %v948 = vadd.f32 %v933, %v941
        %v949 = vadd.f32 %v934, %v941
        %v950 = vadd.f32 %v935, %v941
        %v951 = vpack.c.bf16 %v944, %v943
        %v952 = vpack.c.bf16 %v946, %v945
        %v953 = vpack.c.bf16 %v948, %v947
        %v954 = vpack.c.bf16 %v950, %v949
        %v955 = vld [vmem:[%s4] sm:$0xf]
        %v956 = vld [vmem:[%s4 + $0x4] sm:$0xf]
        %v957 = vld [vmem:[%s4 + $0x8] sm:$0xf]
        %v958 = vld [vmem:[%s4 + $0xc] sm:$0xf]
        %v959 = vld [vmem:[%s4 + $0x10] sm:$0xf]
        %v960 = vld [vmem:[%s4 + $0x14] sm:$0xf]
        %v961 = vld [vmem:[%s4 + $0x18] sm:$0xf]
        %v962 = vld [vmem:[%s4 + $0x1c] sm:$0xf]
        %v963 = vld [vmem:[%s4 + $0x20] sm:$0xf]
        %v964 = vld [vmem:[%s4 + $0x24] sm:$0xf]
        %v965 = vld [vmem:[%s4 + $0x28] sm:$0xf]
        %v966 = vld [vmem:[%s4 + $0x2c] sm:$0xf]
        %v967 = vld [vmem:[%s4 + $0x30] sm:$0xf]
        %v968 = vld [vmem:[%s4 + $0x34] sm:$0xf]
        %v969 = vld [vmem:[%s4 + $0x38] sm:$0xf]
        %v970 = vld [vmem:[%s4 + $0x3c] sm:$0xf]
        %v987 = vunpack.c.l.b16 %v955
        %v988 = vunpack.c.l.b16 %v956
        %v989 = vunpack.c.l.b16 %v957
        %v990 = vunpack.c.l.b16 %v958
        %v991 = vunpack.c.l.b16 %v959
        %v992 = vunpack.c.l.b16 %v960
        %v993 = vunpack.c.l.b16 %v961
        %v994 = vunpack.c.l.b16 %v962
        %v995 = vunpack.c.l.b16 %v963
        %v996 = vunpack.c.l.b16 %v964
        %v997 = vunpack.c.l.b16 %v965
        %v998 = vunpack.c.l.b16 %v966
        %v999 = vunpack.c.l.b16 %v967
        %v1000 = vunpack.c.l.b16 %v968
        %v1001 = vunpack.c.l.b16 %v969
        %v1002 = vunpack.c.l.b16 %v970
        %v1003 = vpack.c.b16 %v988, %v987
        %v1004 = vpack.c.b16 %v990, %v989
        %v1005 = vpack.c.b16 %v992, %v991
        %v1006 = vpack.c.b16 %v994, %v993
        %v1007 = vpack.c.b16 %v996, %v995
        %v1008 = vpack.c.b16 %v998, %v997
        %v1009 = vpack.c.b16 %v1000, %v999
        %v1010 = vpack.c.b16 %v1002, %v1001
        %1019 = vmatprep.subr.bf16.mxu0 0
        %1020 = vmatpush1.bf16.msra.mxu0 %v1003
        %1021 = vmatprep.subr.bf16.mxu0 0
        %1022 = vmatpush1.bf16.msra.mxu0 %v1004
        %1023 = vmatprep.subr.bf16.mxu0 0
        %1024 = vmatpush1.bf16.msra.mxu0 %v1005
        %1025 = vmatprep.subr.bf16.mxu0 0
        %1026 = vmatpush1.bf16.msra.mxu0 %v1006
        %1027 = vmatprep.subr.bf16.mxu0 0
        %1028 = vmatpush1.bf16.msra.mxu0 %v1007
        %1029 = vmatprep.subr.bf16.mxu0 0
        %1030 = vmatpush1.bf16.msra.mxu0 %v1008
        %1031 = vmatprep.subr.bf16.mxu0 0
        %1032 = vmatpush1.bf16.msra.mxu0 %v1009
        %1033 = vmatprep.subr.bf16.mxu0 0
        %1034 = vmatpush1.bf16.msra.mxu0 %v1010
        %1035 = vmatprep.subr.bf16.mxu0 0
        %1036 = vmatpush1.bf16.msra.mxu0 0
        %1037 = vmatprep.subr.bf16.mxu0 0
        %1038 = vmatpush1.bf16.msra.mxu0 0
        %1039 = vmatprep.subr.bf16.mxu0 0
        %1040 = vmatpush1.bf16.msra.mxu0 0
        %1041 = vmatprep.subr.bf16.mxu0 0
        %1042 = vmatpush1.bf16.msra.mxu0 0
        %1043 = vmatprep.subr.bf16.mxu0 0
        %1044 = vmatpush1.bf16.msra.mxu0 0
        %1045 = vmatprep.subr.bf16.mxu0 0
        %1046 = vmatpush1.bf16.msra.mxu0 0
        %1047 = vmatprep.subr.bf16.mxu0 0
        %1048 = vmatpush1.bf16.msra.mxu0 0
        %1049 = vmatprep.subr.bf16.mxu0 0
        %1050 = vmatpush1.bf16.msra.mxu0 0
        %1051 = vmatprep.mubr.bf16.mxu0 0
        %1052 = vmatmul.mubr.bf16.gmra.mrb[0].mxu0 %v951
        %v1053 = vpop.f32.mrb[0].mxu0
        %v1054 = vadd.f32 0.0, %v1053
        %v1055 = vpop.f32.mrb[0].mxu0
        %v1056 = vpop.f32.mrb[0].mxu0
        %v1057 = vadd.f32 0.0, %v1056
        %v1058 = vpop.f32.mrb[0].mxu0
        %1059 = vmatprep.mubr.bf16.mxu0 0
        %1060 = vmatmul.mubr.bf16.gmra.mrb[0].mxu0 %v952
        %v1061 = vpop.f32.mrb[0].mxu0
        %v1062 = vadd.f32 0.0, %v1061
        %v1063 = vpop.f32.mrb[0].mxu0
        %v1064 = vpop.f32.mrb[0].mxu0
        %v1065 = vadd.f32 0.0, %v1064
        %v1066 = vpop.f32.mrb[0].mxu0
        %1067 = vmatprep.mubr.bf16.mxu0 0
        %1068 = vmatmul.mubr.bf16.gmra.mrb[0].mxu0 %v953
        %v1069 = vpop.f32.mrb[0].mxu0
        %v1070 = vadd.f32 0.0, %v1069
        %v1071 = vpop.f32.mrb[0].mxu0
        %v1072 = vpop.f32.mrb[0].mxu0
        %v1073 = vadd.f32 0.0, %v1072
        %v1074 = vpop.f32.mrb[0].mxu0
        %1075 = vmatprep.mubr.bf16.mxu0 0
        %1076 = vmatmul.mubr.bf16.gmra.mrb[0].mxu0 %v954
        %v1077 = vpop.f32.mrb[0].mxu0
        %v1078 = vadd.f32 0.0, %v1077
        %v1079 = vpop.f32.mrb[0].mxu0
        %v1080 = vpop.f32.mrb[0].mxu0
        %v1081 = vadd.f32 0.0, %v1080
        %v1082 = vpop.f32.mrb[0].mxu0
        %1083 = vdwg.mxu0
        %v1084 = vpack.c.bf16 %v1057, %v1054
        %v1085 = vpack.c.bf16 %v1065, %v1062
        %v1086 = vpack.c.bf16 %v1073, %v1070
        %v1087 = vpack.c.bf16 %v1081, %v1078
        %v1092 = vunpack.c.l.b16 %v1084
        %v1093 = vunpack.c.h.b16 %v1084
        %v1094 = vunpack.c.l.b16 %v1085
        %v1095 = vunpack.c.h.b16 %v1085
        %v1096 = vunpack.c.l.b16 %v1086
        %v1097 = vunpack.c.h.b16 %v1086
        %v1098 = vunpack.c.l.b16 %v1087
        %v1099 = vunpack.c.h.b16 %v1087
        %v1100 = vpack.c.b16 %v1092, %v1092
        %v1101 = vpack.c.b16 %v1093, %v1093
        %v1102 = vpack.c.b16 %v1094, %v1094
        %v1103 = vpack.c.b16 %v1095, %v1095
        %v1104 = vpack.c.b16 %v1096, %v1096
        %v1105 = vpack.c.b16 %v1097, %v1097
        %v1106 = vpack.c.b16 %v1098, %v1098
        %v1107 = vpack.c.b16 %v1099, %v1099
        %1116 = vst [vmem:[%s326] sm:$0xf] %v1100
        %1117 = vst [vmem:[%s326 + $0x4] sm:$0xf] %v1101
        %1118 = vst [vmem:[%s326 + $0x8] sm:$0xf] %v1102
        %1119 = vst [vmem:[%s326 + $0xc] sm:$0xf] %v1103
        %1120 = vst [vmem:[%s326 + $0x10] sm:$0xf] %v1104
        %1121 = vst [vmem:[%s326 + $0x14] sm:$0xf] %v1105
        %1122 = vst [vmem:[%s326 + $0x18] sm:$0xf] %v1106
        %1123 = vst [vmem:[%s326 + $0x1c] sm:$0xf] %v1107
        %s1124 = sand.u32 %s207, 1
        %s1125 = scalar_lea.sflag [#allocation3], %s1124
        %s1126 = sand.u32 %s207, 1
        %s1127 = smul.addr %s1126, 32
        %s1128 = scalar_lea.vmem [#allocation2], %s1127
        // Predicated region
        $region49: #{tpu_custom_call.1} parent=47 // pred_check
          %p1129 = pneg %p217
        $region50: #{tpu_custom_call.1} parent=47 // pred_check_branch
          %1131 = sbr.rel (%p1129) target = $region52
        $region51: #{tpu_custom_call.1} parent=47 // pred_region
          %s1132 = smul.u32 8, %s26
          %s1134 = ssub.s32 512, 512
          %1135 = vsyncadd %s1125, %s1134
          %s1136 = smul.addr %s25, 8
          %s1137 = sadd.s32 %s1132, %s1136
          %s1138 = smul.addr %s1137, 64
          %s1139 = scalar_lea.hbm %s7, %s1138
          %s1140 = sshll.u32 %s1128, 4
          %s1141 = int_to_ptr.vmem [resolvable:$true] %s1140
          %1146 = dma.vmem_to_hbm [thread:$0]  %s1141, 512, %s1139, %s1125, 64, 64, 4
        $region52: #{tpu_custom_call.1} parent=47 // pred_fallthru
          _
      $region48: #{tpu_custom_call.1} parent=5 // pred_fallthru
        _
      %p1147 = scmp.le.s32.totalorder 2, %s16
      // Predicated region
      $region53: #{tpu_custom_call.1} parent=5 // pred_check
        %p1148 = pneg %p1147
      $region54: #{tpu_custom_call.1} parent=5 // pred_check_branch
        %1150 = sbr.rel (%p1148) target = $region56
      $region55: #{tpu_custom_call.1} parent=5 // pred_region
        %s1151 = ssub.s32 %s16, 2
        // Predicated region
        $region57: #{tpu_custom_call.1} parent=55 // pred_check
          %p1152 = pneg %p223
        $region58: #{tpu_custom_call.1} parent=55 // pred_check_branch
          %1154 = sbr.rel (%p1152) target = $region60
        $region59: #{tpu_custom_call.1} parent=55 // pred_region
          %s1155 = sand.u32 %s208, 1
          %s1156 = scalar_lea.sflag [#allocation3], %s1155
          %s1157 = sand.u32 %s208, 1
          %s1158 = smul.addr %s1157, 32
          %s1159 = scalar_lea.vmem [#allocation2], %s1158
          %1160 = dma.done %s1156, 512
        $region60: #{tpu_custom_call.1} parent=55 // pred_fallthru
          _
      $region56: #{tpu_custom_call.1} parent=5 // pred_fallthru
        _
    $region6: #{tpu_custom_call.1} parent=1 // loop_footer
      %s20 = sadd.s32 1, %s16
    $region7: #{tpu_custom_call.1} parent=1 // loop_footer_branch
      %15 = sbr.rel target = $region3
    $region8: #{tpu_custom_call.1} parent=1 // loop_exit
      _
    %1161 = vsyncpa [#allocation3], 1
    %s1162 = scalar_lea.sflag [#allocation3], 1
    %1163 = vsyncpa %s1162, 1

</llo_original>
